<compile_context>
chip_gen: v5e
topology: v5e:2x2
jax: 0.10.0
libtpu: 0.0.40
codegen_flags: <defaults>
</compile_context>

<pallas_src>
import functools
import math

import jax
import jax.numpy as jnp
from jax.experimental import pallas as pl
from jax.experimental.pallas import tpu as pltpu


def _get_pad(size: int, multiple: int):
    new_size = math.ceil(size / multiple) * multiple
    pad = new_size - size
    left = pad // 2
    right = pad - left
    return left, right


# ---------------------------------------------------------------------------
# Best-effort, trace-time hardware introspection.
# ---------------------------------------------------------------------------

def _vmem_capacity_bytes() -> int:
    try:
        info = pltpu.get_tpu_info()
        cap = getattr(info, "vmem_capacity_bytes", None)
        if cap:
            return int(cap)
    except Exception:
        pass
    return 64 * 1024 * 1024  # conservative default: v7x per-TC VMEM


def _num_tensorcores() -> int:
    """Best-effort TensorCore count; only used for the grid-step floor."""
    try:
        info = pltpu.get_tpu_info()
        for name in ("num_cores", "core_count", "num_tensorcores"):
            n = getattr(info, name, None)
            if n:
                return max(1, int(n))
    except Exception:
        pass
    try:
        n = getattr(jax.devices()[0], "num_cores", None)
        if n:
            return max(1, int(n))
    except Exception:
        pass
    return 1


# ---------------------------------------------------------------------------
# Kernel
# ---------------------------------------------------------------------------

def _center_pad_kernel(x_ref, o_ref, *, pad_top, pad_bottom, pad_left, pad_right):
    """x_ref: (cb, H, W) input block; o_ref: (cb, Ho, Wo) output block.

    Zero only the four (disjoint) pad bands, then write the interior with a
    single windowed store.  No concatenate temporaries.
    """
    cb, h, w = x_ref.shape
    ho, wo = o_ref.shape[1], o_ref.shape[2]
    dt = o_ref.dtype

    if pad_top:
        o_ref[:, pl.ds(0, pad_top), :] = jnp.zeros((cb, pad_top, wo), dt)
    if pad_bottom:
        o_ref[:, pl.ds(ho - pad_bottom, pad_bottom), :] = jnp.zeros(
            (cb, pad_bottom, wo), dt)
    if pad_left:
        o_ref[:, pl.ds(pad_top, h), pl.ds(0, pad_left)] = jnp.zeros(
            (cb, h, pad_left), dt)
    if pad_right:
        o_ref[:, pl.ds(pad_top, h), pl.ds(wo - pad_right, pad_right)] = jnp.zeros(
            (cb, h, pad_right), dt)

    # Interior: one windowed store (masked / lane-shifted by Mosaic; hidden
    # under the HBM DMA traffic that bounds this kernel).
    o_ref[:, pl.ds(pad_top, h), pl.ds(pad_left, w)] = x_ref[...]


def _pick_channel_block(nc: int, slice_bytes: int, block_budget: int,
                        num_cores: int) -> int:
    """Largest channel block within the VMEM budget, keeping enough grid steps.

    `slice_bytes` is the per-channel (input + output) VMEM footprint.  The
    pipeline double-buffers both, so 2 * cb * slice_bytes ~= vmem_limit / 2
    when cb == block_budget // slice_bytes.
    """
    cb = max(1, block_budget // max(1, slice_bytes))
    cb = min(cb, nc)
    # >= 2 steps per TensorCore: gives input-prefetch / output-writeback
    # overlap within a core and lets megacore chips split the grid.
    min_steps = 2 * max(1, num_cores)
    if nc >= min_steps:
        cb = min(cb, nc // min_steps)
    return max(1, cb)


# ---------------------------------------------------------------------------
# Wrapper
# ---------------------------------------------------------------------------

def center_padding(x: jax.Array, multiple: int, *, force_pallas: bool = False,
                   block_channels: int | None = None) -> jax.Array:
    """Pallas equivalent of CenterPadding(multiple)(x) for NCHW inputs."""
    if x.ndim != 4:
        # TODO(synk): Pallas path only implements the 4-D NCHW case; the
        # PyTorch module handles arbitrary trailing spatial dims.
        pads = [(0, 0), (0, 0)] + [_get_pad(s, multiple) for s in x.shape[2:]]
        return jnp.pad(x, pads, mode="constant", constant_values=0)

    N, C, H, W = x.shape
    pt, pb = _get_pad(H, multiple)
    pleft, pright = _get_pad(W, multiple)
    Ho = H + pt + pb
    Wo = W + pleft + pright
    if Ho == H and Wo == W:
        return x

    itemsize = jnp.dtype(x.dtype).itemsize
    xla_pad = lambda: jnp.pad(
        x, ((0, 0), (0, 0), (pt, pb), (pleft, pright)),
        mode="constant", constant_values=0)

    # Small / narrow outputs: XLA's native Pad is already at roofline; the
    # fixed pallas_call + per-step overhead dominates (worst on v7x).
    out_bytes = N * C * Ho * Wo * itemsize
    if not force_pallas and (Wo < 128 or out_bytes < 4 * 1024 * 1024):
        return xla_pad()

    # Generation-aware VMEM budgeting (v5e/v6e: 128 MiB -> limit 80 MiB,
    # block budget 20 MiB; v7x: 64 MiB/TC -> limit 40 MiB, block budget 10 MiB).
    vmem_cap = _vmem_capacity_bytes()
    vmem_limit = max(32 * 1024 * 1024, min((vmem_cap * 5) // 8, 100 * 1024 * 1024))
    block_budget = vmem_limit // 4  # double-buffered in+out ~= vmem_limit / 2

    slice_bytes = (H * W + Ho * Wo) * itemsize  # per-channel in+out footprint
    if slice_bytes > block_budget:
        # Even a single-channel slab would blow VMEM once double-buffered:
        # degrade gracefully instead of compiling into a VMEM OOM.
        # TODO(synk): add an H-tiling grid axis for very large spatial dims.
        return xla_pad()

    NC = N * C
    cb = _pick_channel_block(NC, slice_bytes, block_budget, _num_tensorcores())
    if block_channels is not None:  # test hook
        cb = max(1, min(block_channels, NC, block_budget // slice_bytes))
    nsteps = -(-NC // cb)  # ceil; ragged last block is masked by Pallas

    xf = x.reshape(NC, H, W)  # collapse N*C; leading-dim reshape is free.

    kern = functools.partial(
        _center_pad_kernel,
        pad_top=pt, pad_bottom=pb, pad_left=pleft, pad_right=pright,
    )
    out = pl.pallas_call(
        kern,
        out_shape=jax.ShapeDtypeStruct((NC, Ho, Wo), x.dtype),
        grid=(nsteps,),
        in_specs=[pl.BlockSpec((cb, H, W), lambda i: (i, 0, 0))],
        out_specs=pl.BlockSpec((cb, Ho, Wo), lambda i: (i, 0, 0)),
        compiler_params=pltpu.CompilerParams(
            dimension_semantics=("parallel",),
            vmem_limit_bytes=vmem_limit,
        ),
        cost_estimate=pl.CostEstimate(
            flops=0,
            transcendentals=0,
            bytes_accessed=NC * slice_bytes,
        ),
    )(xf)
    return out.reshape(N, C, Ho, Wo)


def _reference_center_padding(x: jax.Array, multiple: int) -> jax.Array:
    """Plain-JAX reference matching torch F.pad semantics (NCHW)."""
    pt, pb = _get_pad(x.shape[2], multiple)
    pleft, pright = _get_pad(x.shape[3], multiple)
    return jnp.pad(
        x, ((0, 0), (0, 0), (pt, pb), (pleft, pright)),
        mode="constant", constant_values=0,
    )


if __name__ == "__main__":
    key = jax.random.PRNGKey(0)
    k1, k2, k3, k4 = jax.random.split(key, 4)

    # 1) Asymmetric center padding on both dims (16 -> 21, multiple=7:
    #    left=2, right=3).  Forced onto the Pallas path despite the small size.
    x1 = jax.random.normal(k1, (2, 4, 16, 16), dtype=jnp.float32)
    o1 = jax.block_until_ready(center_padding(x1, 7, force_pallas=True))
    r1 = _reference_center_padding(x1, 7)
    assert o1.shape == r1.shape and o1.dtype == r1.dtype, (o1.shape, o1.dtype)
    assert jnp.array_equal(o1, r1), "CenterPadding mismatch (test 1)"

    # 2) Ragged channel grid: NC=7 with block_channels=3 -> grid=3 and a
    #    masked last block (exercises the cdiv grid path).
    x2 = jax.random.normal(k2, (1, 7, 30, 20), dtype=jnp.float32)
    o2 = jax.block_until_ready(
        center_padding(x2, 16, force_pallas=True, block_channels=3))
    r2 = _reference_center_padding(x2, 16)
    assert o2.shape == r2.shape, (o2.shape, r2.shape)
    assert jnp.array_equal(o2, r2), "CenterPadding mismatch (test 2, ragged)"

    # 3) Only the last dim needs padding (pad_top = pad_bottom = 0).
    x3 = jax.random.normal(k3, (1, 3, 16, 20), dtype=jnp.float32)
    o3 = jax.block_until_ready(center_padding(x3, 16, force_pallas=True))
    r3 = _reference_center_padding(x3, 16)
    assert o3.shape == r3.shape, (o3.shape, r3.shape)
    assert jnp.array_equal(o3, r3), "CenterPadding mismatch (test 3, W-only)"

    # 4) Small-shape dispatch: takes the XLA-native pad fallback on its own.
    x4 = jax.random.normal(k4, (2, 4, 16, 16), dtype=jnp.float32)
    o4 = jax.block_until_ready(center_padding(x4, 14))
    r4 = _reference_center_padding(x4, 14)
    assert o4.shape == r4.shape and jnp.array_equal(o4, r4), "dispatch fallback"

    print("KERNEL_OK")
</pallas_src>

<mosaic_0001>
module attributes {stable_mosaic.version = 11 : i64} {
  func.func @_center_pad_kernel(%arg0: i32, %arg1: memref<4x16x16xf32, #tpu.memory_space<vmem>>, %arg2: memref<4x21x21xf32, #tpu.memory_space<vmem>>) attributes {dimension_semantics = [#tpu.dimension_semantics<parallel>], iteration_bounds = array<i64: 2>, scalar_prefetch = 0 : i64, scratch_operands = 0 : i64, tpu.core_type = #tpu.core_type<tc>, window_params = [{transform_indices = @transform_0, window_bounds = array<i64: 4, 16, 16>}, {transform_indices = @transform_1, window_bounds = array<i64: 4, 21, 21>}]} {
    %cst = arith.constant 0.000000e+00 : f32
    %0 = vector.broadcast %cst : f32 to vector<4x2x21xf32>
    %c0 = arith.constant 0 : index
    %c0_0 = arith.constant 0 : index
    %c0_1 = arith.constant 0 : index
    %1 = vector.load %arg2[%c0, %c0_0, %c0_1] : memref<4x21x21xf32, #tpu.memory_space<vmem>>, vector<4x2x21xf32>
    tpu.vector_store %arg2[%c0, %c0_0, %c0_1], %0 {strides = array<i32>} : memref<4x21x21xf32, #tpu.memory_space<vmem>>, vector<4x2x21xf32>,
    %cst_2 = arith.constant 0.000000e+00 : f32
    %2 = vector.broadcast %cst_2 : f32 to vector<4x3x21xf32>
    %c0_3 = arith.constant 0 : index
    %c18 = arith.constant 18 : index
    %c0_4 = arith.constant 0 : index
    %3 = vector.load %arg2[%c0_3, %c18, %c0_4] : memref<4x21x21xf32, #tpu.memory_space<vmem>>, vector<4x3x21xf32>
    tpu.vector_store %arg2[%c0_3, %c18, %c0_4], %2 {strides = array<i32>} : memref<4x21x21xf32, #tpu.memory_space<vmem>>, vector<4x3x21xf32>,
    %cst_5 = arith.constant 0.000000e+00 : f32
    %4 = vector.broadcast %cst_5 : f32 to vector<4x16x2xf32>
    %c0_6 = arith.constant 0 : index
    %c2 = arith.constant 2 : index
    %c0_7 = arith.constant 0 : index
    %5 = vector.load %arg2[%c0_6, %c2, %c0_7] : memref<4x21x21xf32, #tpu.memory_space<vmem>>, vector<4x16x2xf32>
    tpu.vector_store %arg2[%c0_6, %c2, %c0_7], %4 {strides = array<i32>} : memref<4x21x21xf32, #tpu.memory_space<vmem>>, vector<4x16x2xf32>,
    %cst_8 = arith.constant 0.000000e+00 : f32
    %6 = vector.broadcast %cst_8 : f32 to vector<4x16x3xf32>
    %c0_9 = arith.constant 0 : index
    %c2_10 = arith.constant 2 : index
    %c18_11 = arith.constant 18 : index
    %7 = vector.load %arg2[%c0_9, %c2_10, %c18_11] : memref<4x21x21xf32, #tpu.memory_space<vmem>>, vector<4x16x3xf32>
    tpu.vector_store %arg2[%c0_9, %c2_10, %c18_11], %6 {strides = array<i32>} : memref<4x21x21xf32, #tpu.memory_space<vmem>>, vector<4x16x3xf32>,
    %c0_12 = arith.constant 0 : index
    %c0_13 = arith.constant 0 : index
    %c0_14 = arith.constant 0 : index
    %8 = vector.load %arg1[%c0_12, %c0_13, %c0_14] : memref<4x16x16xf32, #tpu.memory_space<vmem>>, vector<4x16x16xf32>
    %c0_15 = arith.constant 0 : index
    %c2_16 = arith.constant 2 : index
    %c2_17 = arith.constant 2 : index
    %9 = vector.load %arg2[%c0_15, %c2_16, %c2_17] : memref<4x21x21xf32, #tpu.memory_space<vmem>>, vector<4x16x16xf32>
    tpu.vector_store %arg2[%c0_15, %c2_16, %c2_17], %8 {strides = array<i32>} : memref<4x21x21xf32, #tpu.memory_space<vmem>>, vector<4x16x16xf32>,
    return
  }
  func.func @transform_0(%arg0: i32) -> (i32, i32, i32) {
    %c0_i32 = arith.constant 0 : i32
    %c0_i32_0 = arith.constant 0 : i32
    %c0_i32_1 = arith.constant 0 : i32
    return %arg0, %c0_i32, %c0_i32_0 : i32, i32, i32
  }
  func.func @transform_1(%arg0: i32) -> (i32, i32, i32) {
    %c0_i32 = arith.constant 0 : i32
    %c0_i32_0 = arith.constant 0 : i32
    %c0_i32_1 = arith.constant 0 : i32
    return %arg0, %c0_i32, %c0_i32_0 : i32, i32, i32
  }
}

</mosaic_0001>

<llo_original>
// kernel: tpu_custom_call.1
$region0: #{tpu_custom_call.1}
  #allocation0 [shape = 'u32[]', space=smem, size = 0x4, offset = 0x4, fixed_abs, tag = 'smem constant byte address 0x4 - core index']
  #allocation1 [shape = 'u32[72,128]{1,0:T(1,128)}', space=vmem, size = 0x9000, scoped, tag = 'internal scratch']
  %s0 = inlined_call_operand.hbm [shape: f32[8,16,16], index: 0, kind: input, shape index: {}]
  %s1 = inlined_call_operand.vmem [shape: f32[8,21,21], index: 1, kind: output, shape index: {}]
  %s2 = sld [smem:[#allocation0]]
  $region41: #{tpu_custom_call.1} parent=0
    _
  %s4 = ssub.s32 1, %s2
  %s5 = scalar_select 0, %s4, %s2
  $region1: #{tpu_custom_call.1} parent=0
    #allocation2 [shape = 'u8[65536]{0}', space=vmem, size = 0x10000, scoped, tag = 'input window, operand 0']
    #allocation3 [shape = 's32[2]{0}', space=sflag, size = 0x8, scoped, tag = 'scoped memory for tpu_custom_call.1']
    %6 = vsyncpa [#allocation3], 0
    %s7 = scalar_lea.sflag [#allocation3], 1
    %8 = vsyncpa %s7, 0
    loop: start=0, step=1, limit=4
    $region2: #{tpu_custom_call.1} parent=1 // loop_pre_header
      _
    $region3: #{tpu_custom_call.1} parent=1 // loop_header
      %s10 = sphi 0, %s14
      %p11 = scmp.ge.s32.totalorder %s10, 4
      %s20 = sphi 0, %s22
      %s23 = sphi 0, %s20
      %s24 = sphi 0, %s23
      %s40 = sphi 0, %s24
      %s46 = sphi 0, %s48
      %s49 = sphi 0, %s46
      %s50 = sphi 0, %s49
      %s66 = sphi 0, %s50
    $region4: #{tpu_custom_call.1} parent=1 // loop_header_branch
      %13 = sbr.rel (%p11) target = $region8
    $region5: #{tpu_custom_call.1} parent=1 // loop_body
      %s15 = ssub.s32 %s10, 1
      %s16 = ssub.s32 %s10, 2
      %s17 = sadd.s32 %s10, 1
      %s18 = ssub.s32 %s10, %s17
      %p19 = scmp.eq.s32.totalorder %s18, 0
      %s21 = sadd.s32 %s20, 1
      %s22 = scalar_select %p19, %s20, %s21
      %p25 = pneg %p19
      %p26 = scmp.eq.s32.totalorder %s10, 1
      %p27 = por %p25, %p26
      %p28 = scmp.ne.s32.totalorder %s20, %s23
      %p29 = scmp.eq.s32.totalorder %s10, 0
      %p30 = por %p28, %p29
      %p31 = scmp.ne.s32.totalorder %s20, %s23
      %p32 = scmp.eq.s32.totalorder %s15, 1
      %p33 = por %p31, %p32
      %p34 = scmp.ne.s32.totalorder %s23, %s24
      %p35 = scmp.eq.s32.totalorder %s15, 0
      %p36 = por %p34, %p35
      %p37 = scmp.ne.s32.totalorder %s23, %s24
      %p38 = scmp.eq.s32.totalorder %s16, 1
      %p39 = por %p37, %p38
      %p41 = scmp.ne.s32.totalorder %s24, %s40
      %p42 = scmp.eq.s32.totalorder %s16, 0
      %p43 = por %p41, %p42
      %s44 = ssub.s32 %s10, %s17
      %p45 = scmp.eq.s32.totalorder %s44, 0
      %s47 = sadd.s32 %s46, 1
      %s48 = scalar_select %p45, %s46, %s47
      %p51 = pneg %p45
      %p52 = scmp.eq.s32.totalorder %s10, 1
      %p53 = por %p51, %p52
      %p54 = scmp.ne.s32.totalorder %s46, %s49
      %p55 = scmp.eq.s32.totalorder %s10, 0
      %p56 = por %p54, %p55
      %p57 = scmp.ne.s32.totalorder %s46, %s49
      %p58 = scmp.eq.s32.totalorder %s15, 1
      %p59 = por %p57, %p58
      %p60 = scmp.ne.s32.totalorder %s49, %s50
      %p61 = scmp.eq.s32.totalorder %s15, 0
      %p62 = por %p60, %p61
      %p63 = scmp.ne.s32.totalorder %s49, %s50
      %p64 = scmp.eq.s32.totalorder %s16, 1
      %p65 = por %p63, %p64
      %p67 = scmp.ne.s32.totalorder %s50, %s66
      %p68 = scmp.eq.s32.totalorder %s16, 0
      %p69 = por %p67, %p68
      %p70 = scmp.le.s32.totalorder 1, %s10
      %p71 = scmp.lt.s32.totalorder %s10, 3
      %p72 = pnand %p70, %p71
      %p73 = pneg %p72
      // Predicated region
      $region9: #{tpu_custom_call.1} parent=5 // pred_check
        _
      $region10: #{tpu_custom_call.1} parent=5 // pred_check_branch
        %75 = sbr.rel (%p72) target = $region12
      $region11: #{tpu_custom_call.1} parent=5 // pred_region
        %s76 = ssub.s32 %s10, 1
      $region12: #{tpu_custom_call.1} parent=5 // pred_fallthru
        _
      %p77 = scmp.lt.s32.totalorder %s10, 2
      // Predicated region
      $region13: #{tpu_custom_call.1} parent=5 // pred_check
        %p78 = pneg %p77
      $region14: #{tpu_custom_call.1} parent=5 // pred_check_branch
        %80 = sbr.rel (%p78) target = $region16
      $region15: #{tpu_custom_call.1} parent=5 // pred_region
        // Predicated region
        $region17: #{tpu_custom_call.1} parent=15 // pred_check
          %p81 = pneg %p30
        $region18: #{tpu_custom_call.1} parent=15 // pred_check_branch
          %83 = sbr.rel (%p81) target = $region20
        $region19: #{tpu_custom_call.1} parent=15 // pred_region
          %s84 = sand.u32 %s20, 1
          %s85 = scalar_lea.sflag [#allocation3], %s84
          %s86 = sand.u32 %s20, 1
          %s87 = smul.addr %s86, 64
          %s88 = scalar_lea.vmem [#allocation2], %s87
          %s89 = smul.u32 4, %s10
          %91 = vsyncadd %s85, 0
          %s92 = smul.addr %s89, 2
          %s93 = smul.addr %s92, 8
          %s94 = scalar_lea.hbm %s0, %s93
          %s95 = sshll.u32 %s94, 4
          %s96 = int_to_ptr.hbm [resolvable:$true] %s95
          %s97 = sshll.u32 %s88, 4
          %s98 = int_to_ptr.vmem [resolvable:$true] %s97
          %103 = dma.hbm_to_vmem [thread:$0]  %s96, 1024, %s98, %s85, 128, 128, 8
        $region20: #{tpu_custom_call.1} parent=15 // pred_fallthru
          _
      $region16: #{tpu_custom_call.1} parent=5 // pred_fallthru
        _
      %p104 = scmp.le.s32.totalorder 1, %s10
      %p105 = scmp.lt.s32.totalorder %s10, 3
      %p106 = pnand %p104, %p105
      %p107 = pneg %p106
      // Predicated region
      $region21: #{tpu_custom_call.1} parent=5 // pred_check
        _
      $region22: #{tpu_custom_call.1} parent=5 // pred_check_branch
        %109 = sbr.rel (%p106) target = $region24
      $region23: #{tpu_custom_call.1} parent=5 // pred_region
        %s110 = ssub.s32 %s10, 1
        %s111 = sand.u32 %s23, 1
        %s112 = scalar_lea.sflag [#allocation3], %s111
        %s113 = sand.u32 %s23, 1
        %s114 = smul.addr %s113, 64
        %s115 = scalar_lea.vmem [#allocation2], %s114
        // Predicated region
        $region25: #{tpu_custom_call.1} parent=23 // pred_check
          %p116 = pneg %p36
        $region26: #{tpu_custom_call.1} parent=23 // pred_check_branch
          %118 = sbr.rel (%p116) target = $region28
        $region27: #{tpu_custom_call.1} parent=23 // pred_region
          %120 = dma.done %s112, 1024
        $region28: #{tpu_custom_call.1} parent=23 // pred_fallthru
          _
        %s121 = sand.u32 %s23, 1
        %s122 = scalar_lea.sflag [#allocation3], %s121
        %s123 = sand.u32 %s23, 1
        %s124 = smul.addr %s123, 64
        %s125 = scalar_lea.vmem [#allocation2], %s124
        %p126 = pneg %p36
        %p127 = pneg %p33
        %p128 = pneg %p62
        %p129 = pneg %p59
        %s130 = smul.u32 4, %s15
        %p131 = scmp.lt.s32.totalorder %s130, 7
        %s132 = scalar_select %p131, %s130, 7
        %s133 = smul.addr %s132, 3
        %s134 = smul.addr %s133, 8
        %s135 = scalar_lea.vmem %s1, %s134
        %s136 = smul.u32 4, %s15
        %s137 = smul.u32 4, %s15
        %p138 = scmp.lt.s32.totalorder %s137, 7
        %s139 = scalar_select %p138, %s137, 7
        %s140 = smul.addr %s139, 3
        %s141 = smul.addr %s140, 8
        %s142 = scalar_lea.vmem %s1, %s141
        %s143 = smul.u32 4, %s15
        %vm144 = vcmask 164864
        %145 = vst.msk [vmem:[%s142] sm:$0x3] %vm144, 0.0
        %146 = vst.msk [vmem:[%s142 + $0x18] sm:$0x3] %vm144, 0.0
        %147 = vst.msk [vmem:[%s142 + $0x30] sm:$0x3] %vm144, 0.0
        %148 = vst.msk [vmem:[%s142 + $0x48] sm:$0x3] %vm144, 0.0
        %vm149 = vcmask 165888
        %150 = vst.msk [vmem:[%s142 + $0x12] sm:$0x7] %vm149, 0.0
        %151 = vst.msk [vmem:[%s142 + $0x2a] sm:$0x7] %vm149, 0.0
        %152 = vst.msk [vmem:[%s142 + $0x42] sm:$0x7] %vm149, 0.0
        %153 = vst.msk [vmem:[%s142 + $0x5a] sm:$0x7] %vm149, 0.0
        %vm154 = vcmask 15360
        %155 = vst.msk [vmem:[%s142 + $0x2] sm:$0xff] %vm154, 0.0
        %156 = vst.msk [vmem:[%s142 + $0xa] sm:$0xff] %vm154, 0.0
        %157 = vst.msk [vmem:[%s142 + $0x1a] sm:$0xff] %vm154, 0.0
        %158 = vst.msk [vmem:[%s142 + $0x22] sm:$0xff] %vm154, 0.0
        %159 = vst.msk [vmem:[%s142 + $0x32] sm:$0xff] %vm154, 0.0
        %160 = vst.msk [vmem:[%s142 + $0x3a] sm:$0xff] %vm154, 0.0
        %161 = vst.msk [vmem:[%s142 + $0x4a] sm:$0xff] %vm154, 0.0
        %162 = vst.msk [vmem:[%s142 + $0x52] sm:$0xff] %vm154, 0.0
        %vm163 = vcmask 171152
        %164 = vst.msk [vmem:[%s142 + $0x2] sm:$0xff] %vm163, 0.0
        %165 = vst.msk [vmem:[%s142 + $0xa] sm:$0xff] %vm163, 0.0
        %166 = vst.msk [vmem:[%s142 + $0x1a] sm:$0xff] %vm163, 0.0
        %167 = vst.msk [vmem:[%s142 + $0x22] sm:$0xff] %vm163, 0.0
        %168 = vst.msk [vmem:[%s142 + $0x32] sm:$0xff] %vm163, 0.0
        %169 = vst.msk [vmem:[%s142 + $0x3a] sm:$0xff] %vm163, 0.0
        %170 = vst.msk [vmem:[%s142 + $0x4a] sm:$0xff] %vm163, 0.0
        %171 = vst.msk [vmem:[%s142 + $0x52] sm:$0xff] %vm163, 0.0
        %v172 = vld [vmem:[%s115] sm:$0xff]
        %v173 = vld [vmem:[%s115 + $0x8] sm:$0xff]
        %v174 = vld [vmem:[%s115 + $0x10] sm:$0xff]
        %v175 = vld [vmem:[%s115 + $0x18] sm:$0xff]
        %v176 = vld [vmem:[%s115 + $0x20] sm:$0xff]
        %v177 = vld [vmem:[%s115 + $0x28] sm:$0xff]
        %v178 = vld [vmem:[%s115 + $0x30] sm:$0xff]
        %v179 = vld [vmem:[%s115 + $0x38] sm:$0xff]
        %188 = vrot.lane.b32.xlu0 %v172, 2
        %v189 = vpop.permute.xlu0 %188
        %190 = vrot.lane.b32.xlu0 %v173, 2
        %v191 = vpop.permute.xlu0 %190
        %192 = vrot.lane.b32.xlu0 %v174, 2
        %v193 = vpop.permute.xlu0 %192
        %194 = vrot.lane.b32.xlu0 %v175, 2
        %v195 = vpop.permute.xlu0 %194
        %196 = vrot.lane.b32.xlu0 %v176, 2
        %v197 = vpop.permute.xlu0 %196
        %198 = vrot.lane.b32.xlu0 %v177, 2
        %v199 = vpop.permute.xlu0 %198
        %200 = vrot.lane.b32.xlu0 %v178, 2
        %v201 = vpop.permute.xlu0 %200
        %202 = vrot.lane.b32.xlu0 %v179, 2
        %v203 = vpop.permute.xlu0 %202
        %vm212 = vcmask 146448
        %213 = vst.msk [vmem:[%s142 + $0x2] sm:$0xff] %vm212, %v189
        %214 = vst.msk [vmem:[%s142 + $0xa] sm:$0xff] %vm212, %v191
        %215 = vst.msk [vmem:[%s142 + $0x1a] sm:$0xff] %vm212, %v193
        %216 = vst.msk [vmem:[%s142 + $0x22] sm:$0xff] %vm212, %v195
        %217 = vst.msk [vmem:[%s142 + $0x32] sm:$0xff] %vm212, %v197
        %218 = vst.msk [vmem:[%s142 + $0x3a] sm:$0xff] %vm212, %v199
        %219 = vst.msk [vmem:[%s142 + $0x4a] sm:$0xff] %vm212, %v201
        %220 = vst.msk [vmem:[%s142 + $0x52] sm:$0xff] %vm212, %v203
        %s221 = smul.u32 4, %s15
        %p222 = scmp.lt.s32.totalorder %s221, 7
        %s223 = scalar_select %p222, %s221, 7
        %s224 = smul.addr %s223, 3
        %s225 = smul.addr %s224, 8
        %s226 = scalar_lea.vmem %s1, %s225
        // Predicated region
        $region29: #{tpu_custom_call.1} parent=23 // pred_check
          %p227 = pneg %p59
        $region30: #{tpu_custom_call.1} parent=23 // pred_check_branch
          %229 = sbr.rel (%p227) target = $region32
        $region31: #{tpu_custom_call.1} parent=23 // pred_region
          %s230 = smul.u32 4, %s15
        $region32: #{tpu_custom_call.1} parent=23 // pred_fallthru
          _
      $region24: #{tpu_custom_call.1} parent=5 // pred_fallthru
        _
      %p231 = scmp.le.s32.totalorder 2, %s10
      // Predicated region
      $region33: #{tpu_custom_call.1} parent=5 // pred_check
        %p232 = pneg %p231
      $region34: #{tpu_custom_call.1} parent=5 // pred_check_branch
        %234 = sbr.rel (%p232) target = $region36
      $region35: #{tpu_custom_call.1} parent=5 // pred_region
        %s235 = ssub.s32 %s10, 2
        // Predicated region
        $region37: #{tpu_custom_call.1} parent=35 // pred_check
          %p236 = pneg %p65
        $region38: #{tpu_custom_call.1} parent=35 // pred_check_branch
          %238 = sbr.rel (%p236) target = $region40
        $region39: #{tpu_custom_call.1} parent=35 // pred_region
          %s239 = smul.u32 4, %s16
          %p240 = scmp.lt.s32.totalorder %s239, 7
          %s241 = scalar_select %p240, %s239, 7
          %s242 = smul.addr %s241, 3
          %s243 = smul.addr %s242, 8
          %s244 = scalar_lea.vmem %s1, %s243
        $region40: #{tpu_custom_call.1} parent=35 // pred_fallthru
          _
      $region36: #{tpu_custom_call.1} parent=5 // pred_fallthru
        _
    $region6: #{tpu_custom_call.1} parent=1 // loop_footer
      %s14 = sadd.s32 1, %s10
    $region7: #{tpu_custom_call.1} parent=1 // loop_footer_branch
      %9 = sbr.rel target = $region3
    $region8: #{tpu_custom_call.1} parent=1 // loop_exit
      _
    %245 = vsyncpa [#allocation3], 1
    %s246 = scalar_lea.sflag [#allocation3], 1
    %247 = vsyncpa %s246, 1

</llo_original>
